<compile_context>
chip_gen: v7x
topology: tpu7x:2x2x1
jax: 0.10.0
libtpu: 0.0.40
codegen_flags: <defaults>
</compile_context>

<pallas_src>
import jax
import jax.numpy as jnp
from jax.experimental import pallas as pl
from jax.experimental.pallas import tpu as pltpu


HIDDEN = 10
LATENT = 2


def _rup(n, m=8):
    return (n + m - 1) // m * m


def _layout(D, H=HIDDEN, L=LATENT):
    """Row offsets of each (pre-transposed) parameter inside the packed buffer.

    Every segment starts on an 8-row (sublane-tile) boundary so the in-kernel
    static ref slices are aligned views.  Weights are stored as [out, in]
    (already transposed for y^T = W^T @ x^T); biases are stored as columns.
    """
    off = {}
    r = 0
    off["w1t"] = r;  r += _rup(H)        # W1^T:        [H, D]
    off["wht"] = r;  r += _rup(2 * L)    # [W21|W22]^T: [2L, H]
    off["w4t"] = r;  r += _rup(D)        # W4^T:        [D, H]
    off["w3t"] = r;  r += _rup(H)        # W3^T:        [H, L] (rank-1 columns)
    off["b1"] = r;   r += _rup(H)        # b1:  column [H, 1]
    off["bh"] = r;   r += _rup(2 * L)    # bh:  column [2L, 1]
    off["b3"] = r;   r += _rup(H)        # b3:  column [H, 1]
    off["b4"] = r;   r += _rup(D)        # b4:  column [D, 1]
    off["rows"] = r
    off["cols"] = max(D, H)
    return off


def pack_params(p, D, H=HIDDEN, L=LATENT):
    """Pack all layer weights/biases into one 2-D f32 buffer (one DMA)."""
    lay = _layout(D, H, L)
    buf = jnp.zeros((lay["rows"], lay["cols"]), jnp.float32)
    buf = buf.at[lay["w1t"]:lay["w1t"] + H, 0:D].set(p["w1"].T)        # [H, D]
    wht = jnp.concatenate([p["w21"], p["w22"]], axis=1).T              # [2L, H]
    buf = buf.at[lay["wht"]:lay["wht"] + 2 * L, 0:H].set(wht)
    buf = buf.at[lay["w4t"]:lay["w4t"] + D, 0:H].set(p["w4"].T)        # [D, H]
    buf = buf.at[lay["w3t"]:lay["w3t"] + H, 0:L].set(p["w3"].T)        # [H, L]
    buf = buf.at[lay["b1"]:lay["b1"] + H, 0].set(p["b1"])
    bh = jnp.concatenate([p["b21"], p["b22"]], axis=0)                 # [2L]
    buf = buf.at[lay["bh"]:lay["bh"] + 2 * L, 0].set(bh)
    buf = buf.at[lay["b3"]:lay["b3"] + H, 0].set(p["b3"])
    buf = buf.at[lay["b4"]:lay["b4"] + D, 0].set(p["b4"])
    return buf, lay


def _make_kernel(D, H, L, lay):
    two_l = 2 * L

    def kernel(x_ref, eps_ref, p_ref, out_ref):
        # Transposed, lane-dense tiles: batch is the lane (last) axis.
        x = x_ref[...]        # [D, T]
        eps = eps_ref[...]    # [L, T]

        # Static, 8-row-aligned views of the packed parameter buffer.
        w1t = p_ref[lay["w1t"]:lay["w1t"] + H, 0:D]        # [H, D]
        wht = p_ref[lay["wht"]:lay["wht"] + two_l, 0:H]    # [2L, H]
        w4t = p_ref[lay["w4t"]:lay["w4t"] + D, 0:H]        # [D, H]
        w3t = p_ref[lay["w3t"]:lay["w3t"] + H, 0:L]        # [H, L]
        b1 = p_ref[lay["b1"]:lay["b1"] + H, 0:1]           # [H, 1]
        bh = p_ref[lay["bh"]:lay["bh"] + two_l, 0:1]       # [2L, 1]
        b3 = p_ref[lay["b3"]:lay["b3"] + H, 0:1]           # [H, 1]
        b4 = p_ref[lay["b4"]:lay["b4"] + D, 0:1]           # [D, 1]

        # encode: h1^T = relu(W1^T @ x^T + b1)            -> [H, T], N=T lane-dense
        h1 = jnp.dot(w1t, x, preferred_element_type=jnp.float32) + b1
        h1 = jnp.maximum(h1, 0.0)

        # fused fc21/fc22 head: enc^T = [mu | logvar]^T   -> [2L, T]
        enc = jnp.dot(wht, h1, preferred_element_type=jnp.float32) + bh
        mu = enc[0:L, :]
        logvar = enc[L:two_l, :]

        # reparameterize: z = mu + eps * exp(0.5 * logvar)  -> [L, T]
        std = jnp.exp(0.5 * logvar)
        z = mu + eps * std

        # decode, stage 1: K=L(=2) matmul as rank-1 VPU FMAs (skip the MXU for
        # a >99%-padding matmul on the serial dependency chain).
        h3 = b3 + w3t[:, 0:1] * z[0:1, :]
        for j in range(1, L):
            h3 = h3 + w3t[:, j:j + 1] * z[j:j + 1, :]
        h3 = jnp.maximum(h3, 0.0)                          # [H, T]

        # decode, stage 2: recon^T = W4^T @ h3^T + b4      -> [D, T]
        recon = jnp.dot(w4t, h3, preferred_element_type=jnp.float32) + b4

        # Single merged output slab [D + 2L, T]; both stores are 128-lane-dense.
        out_ref[0:D, :] = recon.astype(out_ref.dtype)
        out_ref[D:D + two_l, :] = enc.astype(out_ref.dtype)

    return kernel


def vae_forward(x, eps, packed, lay, *, max_tile_b=4096):
    """x: [B, D] f32, eps: [B, latent] f32 (standard-normal noise).

    Returns (recon [B, D], mu [B, latent], logvar [B, latent]).
    """
    B, D = x.shape
    L = eps.shape[1]
    H_rows_out = D + 2 * L

    # Batch is the lane axis: when the grid has >1 step the tile must be a
    # multiple of 128 (the (8,128) rule); for small B collapse to one step.
    if B <= max_tile_b:
        tile_b = _rup(B, 128)
        Bp = tile_b                       # grid = (1,)
    else:
        tile_b = _rup(max_tile_b, 128)
        Bp = _rup(B, tile_b)              # grid >= 2: shardable across v7x TCs

    # VMEM guard: double-buffered x/eps/out blocks + resident params must stay
    # far below v7x's ~32 MiB scoped default (64 MiB physical); 128 MiB v5e/v6e.
    blk_bytes = 4 * tile_b * (D + L + H_rows_out)
    assert 2 * blk_bytes + 4 * packed.size < (16 << 20), "tile_b too large for VMEM"

    # Lane-dense, transposed inputs (wrapper transposes back on the way out).
    x_t = x.T                              # [D, B]
    eps_t = eps.T                          # [L, B]
    if Bp != B:
        # Padded batch columns flow through (logvar=0 -> std=1, no inf/nan)
        # and are sliced off below.
        x_t = jnp.pad(x_t, ((0, 0), (0, Bp - B)))
        eps_t = jnp.pad(eps_t, ((0, 0), (0, Bp - B)))

    grid = (Bp // tile_b,)
    kernel = _make_kernel(D, HIDDEN, L, lay)

    out = pl.pallas_call(
        kernel,
        out_shape=jax.ShapeDtypeStruct((H_rows_out, Bp), jnp.float32),
        grid=grid,
        in_specs=[
            pl.BlockSpec((D, tile_b), lambda i: (0, i)),
            pl.BlockSpec((L, tile_b), lambda i: (0, i)),
            # packed params: constant block index -> resident in VMEM
            pl.BlockSpec((lay["rows"], lay["cols"]), lambda i: (0, 0)),
        ],
        out_specs=pl.BlockSpec((H_rows_out, tile_b), lambda i: (0, i)),
        compiler_params=pltpu.CompilerParams(
            dimension_semantics=("parallel",)),
    )(x_t, eps_t, packed)

    out = out[:, :B]
    recon = out[0:D, :].T
    mu = out[D:D + L, :].T
    logvar = out[D + L:D + 2 * L, :].T
    return recon, mu, logvar


def init_params(key, input_size, hidden=HIDDEN, latent=LATENT):
    """Deterministic synthetic parameters (shapes match the nn.Linear layers),
    stored as [in, out] (transposed relative to torch's [out, in])."""
    ks = jax.random.split(key, 10)

    def lin(kw, kb, fan_in, fan_out):
        scale = 1.0 / jnp.sqrt(jnp.float32(fan_in))
        w = jax.random.uniform(kw, (fan_in, fan_out), jnp.float32, -scale, scale)
        b = jax.random.uniform(kb, (fan_out,), jnp.float32, -scale, scale)
        return w, b

    w1, b1 = lin(ks[0], ks[1], input_size, hidden)
    w21, b21 = lin(ks[2], ks[3], hidden, latent)
    w22, b22 = lin(ks[4], ks[5], hidden, latent)
    w3, b3 = lin(ks[6], ks[7], latent, hidden)
    w4, b4 = lin(ks[8], ks[9], hidden, input_size)
    return dict(w1=w1, b1=b1, w21=w21, b21=b21, w22=w22, b22=b22,
                w3=w3, b3=b3, w4=w4, b4=b4)


def vae_reference(x, eps, p):
    """Pure-JAX reference of the same forward pass (unfused layers)."""
    h1 = jnp.maximum(x @ p["w1"] + p["b1"], 0.0)
    mu = h1 @ p["w21"] + p["b21"]
    logvar = h1 @ p["w22"] + p["b22"]
    z = mu + eps * jnp.exp(0.5 * logvar)
    h3 = jnp.maximum(z @ p["w3"] + p["b3"], 0.0)
    recon = h3 @ p["w4"] + p["b4"]
    return recon, mu, logvar


if __name__ == "__main__":
    key = jax.random.PRNGKey(0)
    k_x, k_eps, k_p = jax.random.split(key, 3)

    B, INPUT_SIZE = 128, 16
    x = jax.random.normal(k_x, (B, INPUT_SIZE), jnp.float32)
    # TODO(synk): eps (torch.randn_like) could be drawn in-kernel via
    # pltpu.prng_seed + pltpu.prng_random_bits (Box-Muller), removing one input
    # DMA; it is kept as an explicit (now lane-dense, transposed) input so the
    # kernel stays deterministically verifiable against the reference.
    eps = jax.random.normal(k_eps, (B, LATENT), jnp.float32)
    params = init_params(k_p, INPUT_SIZE)
    packed, lay = pack_params(params, INPUT_SIZE)

    recon, mu, logvar = vae_forward(x, eps, packed, lay)
    jax.block_until_ready((recon, mu, logvar))

    r_ref, m_ref, lv_ref = vae_reference(x, eps, params)
    assert jnp.allclose(mu, m_ref, atol=1e-5), "mu mismatch"
    assert jnp.allclose(logvar, lv_ref, atol=1e-5), "logvar mismatch"
    assert jnp.allclose(recon, r_ref, atol=1e-5), "recon mismatch"

    print("KERNEL_OK")
</pallas_src>

<mosaic_0001>
module attributes {stable_mosaic.version = 11 : i64} {
  func.func @kernel(%arg0: i32, %arg1: memref<16x128xf32, #tpu.memory_space<vmem>>, %arg2: memref<2x128xf32, #tpu.memory_space<vmem>>, %arg3: memref<112x16xf32, #tpu.memory_space<vmem>>, %arg4: memref<20x128xf32, #tpu.memory_space<vmem>>) attributes {dimension_semantics = [#tpu.dimension_semantics<parallel>], iteration_bounds = array<i64: 1>, scalar_prefetch = 0 : i64, scratch_operands = 0 : i64, tpu.core_type = #tpu.core_type<tc>, window_params = [{transform_indices = @transform_0, window_bounds = array<i64: 16, 128>}, {transform_indices = @transform_1, window_bounds = array<i64: 2, 128>}, {pipeline_mode = #tpu.pipeline_mode<synchronous>, transform_indices = @transform_2, window_bounds = array<i64: 112, 16>}, {transform_indices = @transform_3, window_bounds = array<i64: 20, 128>}]} {
    %c0 = arith.constant 0 : index
    %c0_0 = arith.constant 0 : index
    %0 = vector.load %arg1[%c0, %c0_0] : memref<16x128xf32, #tpu.memory_space<vmem>>, vector<16x128xf32>
    %c0_1 = arith.constant 0 : index
    %c0_2 = arith.constant 0 : index
    %1 = vector.load %arg2[%c0_1, %c0_2] : memref<2x128xf32, #tpu.memory_space<vmem>>, vector<2x128xf32>
    %c0_3 = arith.constant 0 : index
    %c0_4 = arith.constant 0 : index
    %2 = vector.load %arg3[%c0_3, %c0_4] : memref<112x16xf32, #tpu.memory_space<vmem>>, vector<10x16xf32>
    %c16 = arith.constant 16 : index
    %c0_5 = arith.constant 0 : index
    %3 = vector.load %arg3[%c16, %c0_5] : memref<112x16xf32, #tpu.memory_space<vmem>>, vector<4x10xf32>
    %c24 = arith.constant 24 : index
    %c0_6 = arith.constant 0 : index
    %4 = vector.load %arg3[%c24, %c0_6] : memref<112x16xf32, #tpu.memory_space<vmem>>, vector<16x10xf32>
    %c40 = arith.constant 40 : index
    %c0_7 = arith.constant 0 : index
    %5 = vector.load %arg3[%c40, %c0_7] : memref<112x16xf32, #tpu.memory_space<vmem>>, vector<10x2xf32>
    %c56 = arith.constant 56 : index
    %c0_8 = arith.constant 0 : index
    %6 = vector.load %arg3[%c56, %c0_8] : memref<112x16xf32, #tpu.memory_space<vmem>>, vector<10x1xf32>
    %c72 = arith.constant 72 : index
    %c0_9 = arith.constant 0 : index
    %7 = vector.load %arg3[%c72, %c0_9] : memref<112x16xf32, #tpu.memory_space<vmem>>, vector<4x1xf32>
    %c80 = arith.constant 80 : index
    %c0_10 = arith.constant 0 : index
    %8 = vector.load %arg3[%c80, %c0_10] : memref<112x16xf32, #tpu.memory_space<vmem>>, vector<10x1xf32>
    %c96 = arith.constant 96 : index
    %c0_11 = arith.constant 0 : index
    %9 = vector.load %arg3[%c96, %c0_11] : memref<112x16xf32, #tpu.memory_space<vmem>>, vector<16x1xf32>
    %cst = arith.constant dense<0.000000e+00> : vector<10x128xf32>
    %10 = tpu.matmul %2, %0, %cst {dimension_numbers = #tpu.dot_dimension_numbers<[1], [0], [0], [1], [0, 0, 1, 1], [], []>} : vector<10x16xf32>, vector<16x128xf32>, vector<10x128xf32> -> vector<10x128xf32>
    %11 = vector.broadcast %6 : vector<10x1xf32> to vector<10x128xf32>
    %12 = arith.addf %10, %11 : vector<10x128xf32>
    %cst_12 = arith.constant 0.000000e+00 : f32
    %13 = vector.broadcast %cst_12 : f32 to vector<10x128xf32>
    %14 = arith.maximumf %12, %13 : vector<10x128xf32>
    %cst_13 = arith.constant dense<0.000000e+00> : vector<4x128xf32>
    %15 = tpu.matmul %3, %14, %cst_13 {dimension_numbers = #tpu.dot_dimension_numbers<[1], [0], [0], [1], [0, 0, 1, 1], [], []>} : vector<4x10xf32>, vector<10x128xf32>, vector<4x128xf32> -> vector<4x128xf32>
    %16 = vector.broadcast %7 : vector<4x1xf32> to vector<4x128xf32>
    %17 = arith.addf %15, %16 : vector<4x128xf32>
    %18 = vector.extract_strided_slice %17 {offsets = [0, 0], sizes = [2, 128], strides = [1, 1]} : vector<4x128xf32> to vector<2x128xf32>
    %19 = vector.extract_strided_slice %17 {offsets = [2, 0], sizes = [2, 128], strides = [1, 1]} : vector<4x128xf32> to vector<2x128xf32>
    %cst_14 = arith.constant 5.000000e-01 : f32
    %20 = vector.broadcast %cst_14 : f32 to vector<2x128xf32>
    %21 = arith.mulf %20, %19 : vector<2x128xf32>
    %22 = math.exp %21 : vector<2x128xf32>
    %23 = arith.mulf %1, %22 : vector<2x128xf32>
    %24 = arith.addf %18, %23 : vector<2x128xf32>
    %25 = vector.extract_strided_slice %5 {offsets = [0, 0], sizes = [10, 1], strides = [1, 1]} : vector<10x2xf32> to vector<10x1xf32>
    %26 = vector.extract_strided_slice %24 {offsets = [0, 0], sizes = [1, 128], strides = [1, 1]} : vector<2x128xf32> to vector<1x128xf32>
    %27 = vector.broadcast %25 : vector<10x1xf32> to vector<10x128xf32>
    %28 = vector.broadcast %26 : vector<1x128xf32> to vector<10x128xf32>
    %29 = arith.mulf %27, %28 : vector<10x128xf32>
    %30 = vector.broadcast %8 : vector<10x1xf32> to vector<10x128xf32>
    %31 = arith.addf %30, %29 : vector<10x128xf32>
    %32 = vector.extract_strided_slice %5 {offsets = [0, 1], sizes = [10, 1], strides = [1, 1]} : vector<10x2xf32> to vector<10x1xf32>
    %33 = vector.extract_strided_slice %24 {offsets = [1, 0], sizes = [1, 128], strides = [1, 1]} : vector<2x128xf32> to vector<1x128xf32>
    %34 = vector.broadcast %32 : vector<10x1xf32> to vector<10x128xf32>
    %35 = vector.broadcast %33 : vector<1x128xf32> to vector<10x128xf32>
    %36 = arith.mulf %34, %35 : vector<10x128xf32>
    %37 = arith.addf %31, %36 : vector<10x128xf32>
    %cst_15 = arith.constant 0.000000e+00 : f32
    %38 = vector.broadcast %cst_15 : f32 to vector<10x128xf32>
    %39 = arith.maximumf %37, %38 : vector<10x128xf32>
    %cst_16 = arith.constant dense<0.000000e+00> : vector<16x128xf32>
    %40 = tpu.matmul %4, %39, %cst_16 {dimension_numbers = #tpu.dot_dimension_numbers<[1], [0], [0], [1], [0, 0, 1, 1], [], []>} : vector<16x10xf32>, vector<10x128xf32>, vector<16x128xf32> -> vector<16x128xf32>
    %41 = vector.broadcast %9 : vector<16x1xf32> to vector<16x128xf32>
    %42 = arith.addf %40, %41 : vector<16x128xf32>
    %c0_17 = arith.constant 0 : index
    %c0_18 = arith.constant 0 : index
    %43 = vector.load %arg4[%c0_17, %c0_18] : memref<20x128xf32, #tpu.memory_space<vmem>>, vector<16x128xf32>
    tpu.vector_store %arg4[%c0_17, %c0_18], %42 {strides = array<i32>} : memref<20x128xf32, #tpu.memory_space<vmem>>, vector<16x128xf32>,
    %c16_19 = arith.constant 16 : index
    %c0_20 = arith.constant 0 : index
    %44 = vector.load %arg4[%c16_19, %c0_20] : memref<20x128xf32, #tpu.memory_space<vmem>>, vector<4x128xf32>
    tpu.vector_store %arg4[%c16_19, %c0_20], %17 {strides = array<i32>} : memref<20x128xf32, #tpu.memory_space<vmem>>, vector<4x128xf32>,
    return
  }
  func.func @transform_0(%arg0: i32) -> (i32, i32) {
    %c0_i32 = arith.constant 0 : i32
    %c0_i32_0 = arith.constant 0 : i32
    return %c0_i32, %arg0 : i32, i32
  }
  func.func @transform_1(%arg0: i32) -> (i32, i32) {
    %c0_i32 = arith.constant 0 : i32
    %c0_i32_0 = arith.constant 0 : i32
    return %c0_i32, %arg0 : i32, i32
  }
  func.func @transform_2(%arg0: i32) -> (i32, i32) {
    %c0_i32 = arith.constant 0 : i32
    %c0_i32_0 = arith.constant 0 : i32
    %c0_i32_1 = arith.constant 0 : i32
    return %c0_i32, %c0_i32_0 : i32, i32
  }
  func.func @transform_3(%arg0: i32) -> (i32, i32) {
    %c0_i32 = arith.constant 0 : i32
    %c0_i32_0 = arith.constant 0 : i32
    return %c0_i32, %arg0 : i32, i32
  }
}

</mosaic_0001>

<llo_original>
// kernel: tpu_custom_call.1
$region0: #{tpu_custom_call.1}
  #allocation0 [shape = 'u32[]', space=smem, size = 0x4, offset = 0x4, fixed_abs, tag = 'smem constant byte address 0x4 - core index']
  #allocation1 [shape = 'u32[144,128]{1,0:T(1,128)}', space=vmem, size = 0x12000, scoped, tag = 'internal scratch']
  %s0 = inlined_call_operand.vmem [shape: f32[16,128], index: 0, kind: input, shape index: {}]
  %s1 = inlined_call_operand.vmem [shape: f32[2,128], index: 1, kind: input, shape index: {}]
  %s2 = inlined_call_operand.vmem [shape: f32[112,16], index: 2, kind: input, shape index: {}]
  %s3 = inlined_call_operand.hbm [shape: f32[20,128], index: 3, kind: output, shape index: {}]
  %s4 = sld [smem:[#allocation0]]
  $region22: #{tpu_custom_call.1} parent=0
    _
  %s6 = ssub.s32 1, %s4
  %s7 = scalar_select 0, %s6, %s4
  $region1: #{tpu_custom_call.1} parent=0
    #allocation2 [shape = 'u8[12288]{0}', space=vmem, size = 0x3000, scoped, tag = 'output window, operand 0, single buffered']
    #allocation3 [shape = 's32[1]{0}', space=sflag, size = 0x4, scoped, tag = 'scoped memory for tpu_custom_call.1']
    %8 = vsyncpa [#allocation3], 0
    // Predicated region
    $region2: #{tpu_custom_call.1} parent=1 // pred_check
      _
    $region3: #{tpu_custom_call.1} parent=1 // pred_check_branch
      %10 = sbr.rel (0) target = $region5
    $region4: #{tpu_custom_call.1} parent=1 // pred_region
      _
    $region5: #{tpu_custom_call.1} parent=1 // pred_fallthru
      _
    // Predicated region
    $region6: #{tpu_custom_call.1} parent=1 // pred_check
      _
    $region7: #{tpu_custom_call.1} parent=1 // pred_check_branch
      %12 = sbr.rel (0) target = $region9
    $region8: #{tpu_custom_call.1} parent=1 // pred_region
      _
    $region9: #{tpu_custom_call.1} parent=1 // pred_fallthru
      _
    // Predicated region
    $region10: #{tpu_custom_call.1} parent=1 // pred_check
      _
    $region11: #{tpu_custom_call.1} parent=1 // pred_check_branch
      %14 = sbr.rel (0) target = $region13
    $region12: #{tpu_custom_call.1} parent=1 // pred_region
      _
    $region13: #{tpu_custom_call.1} parent=1 // pred_fallthru
      _
    %v15 = vld [vmem:[%s0] sm:$0xff]
    %v16 = vld [vmem:[%s0 + $0x8] sm:$0xff]
    %v17 = vld [vmem:[%s1] sm:$0x3]
    %v18 = vld [vmem:[%s2] sm:$0xff]
    %v19 = vld [vmem:[%s2 + $0x8] sm:$0x3]
    %v20 = vld [vmem:[%s2 + $0x10] sm:$0xf]
    %v21 = vld [vmem:[%s2 + $0x18] sm:$0xff]
    %v22 = vld [vmem:[%s2 + $0x20] sm:$0xff]
    %v23 = vld [vmem:[%s2 + $0x28] sm:$0xff]
    %v24 = vld [vmem:[%s2 + $0x30] sm:$0x3]
    %v25 = vld [vmem:[%s2 + $0x38] sm:$0xff]
    %v26 = vld [vmem:[%s2 + $0x40] sm:$0x3]
    %v27 = vld [vmem:[%s2 + $0x48] sm:$0xf]
    %v28 = vld [vmem:[%s2 + $0x50] sm:$0xff]
    %v29 = vld [vmem:[%s2 + $0x58] sm:$0x3]
    %v30 = vld [vmem:[%s2 + $0x60] sm:$0xff]
    %v31 = vld [vmem:[%s2 + $0x68] sm:$0xff]
    %33 = vset.pattern.permute.xlu0 0
    %34 = vperm.xlu0 %33, %v25
    %v35 = vpop.permute.xlu0 %34
    %38 = vset.pattern.permute.xlu0 0
    %39 = vperm.xlu0 %38, %v26
    %v40 = vpop.permute.xlu0 %39
    %vm42 = vcmask 130048
    %v44 = vsel %vm42, %v18, 0
    %v47 = vsel %vm42, %v19, 0
    %49 = vmatprep.subr.mxu0 0.0
    %50 = vmatpush1.msra.mxu0 %v15
    %51 = vmatprep.subr.mxu0 0.0
    %52 = vmatpush1.msra.mxu0 %v16
    %53 = vmatprep.subr.mxu0 0.0
    %54 = vmatpush1.msra.mxu0 0.0
    %55 = vmatprep.subr.mxu0 0.0
    %56 = vmatpush1.msra.mxu0 0.0
    %57 = vmatprep.subr.mxu0 0.0
    %58 = vmatpush1.msra.mxu0 0.0
    %59 = vmatprep.subr.mxu0 0.0
    %60 = vmatpush1.msra.mxu0 0.0
    %61 = vmatprep.subr.mxu0 0.0
    %62 = vmatpush1.msra.mxu0 0.0
    %63 = vmatprep.subr.mxu0 0.0
    %64 = vmatpush1.msra.mxu0 0.0
    %65 = vmatprep.subr.mxu0 0.0
    %66 = vmatpush1.msra.mxu0 0.0
    %67 = vmatprep.subr.mxu0 0.0
    %68 = vmatpush1.msra.mxu0 0.0
    %69 = vmatprep.subr.mxu0 0.0
    %70 = vmatpush1.msra.mxu0 0.0
    %71 = vmatprep.subr.mxu0 0.0
    %72 = vmatpush1.msra.mxu0 0.0
    %73 = vmatprep.subr.mxu0 0.0
    %74 = vmatpush1.msra.mxu0 0.0
    %75 = vmatprep.subr.mxu0 0.0
    %76 = vmatpush1.msra.mxu0 0.0
    %77 = vmatprep.subr.mxu0 0.0
    %78 = vmatpush1.msra.mxu0 0.0
    %79 = vmatprep.subr.mxu0 0.0
    %80 = vmatpush1.msra.mxu0 0.0
    %81 = vmatprep.subr.mxu0 0.0
    %82 = vmatpush1.msra.mxu0 0.0
    %83 = vmatprep.subr.mxu0 0.0
    %84 = vmatpush1.msra.mxu0 0.0
    %85 = vmatprep.subr.mxu0 0.0
    %86 = vmatpush1.msra.mxu0 0.0
    %87 = vmatprep.subr.mxu0 0.0
    %88 = vmatpush1.msra.mxu0 0.0
    %89 = vmatprep.subr.mxu0 0.0
    %90 = vmatpush1.msra.mxu0 0.0
    %91 = vmatprep.subr.mxu0 0.0
    %92 = vmatpush1.msra.mxu0 0.0
    %93 = vmatprep.subr.mxu0 0.0
    %94 = vmatpush1.msra.mxu0 0.0
    %95 = vmatprep.subr.mxu0 0.0
    %96 = vmatpush1.msra.mxu0 0.0
    %97 = vmatprep.subr.mxu0 0.0
    %98 = vmatpush1.msra.mxu0 0.0
    %99 = vmatprep.subr.mxu0 0.0
    %100 = vmatpush1.msra.mxu0 0.0
    %101 = vmatprep.subr.mxu0 0.0
    %102 = vmatpush1.msra.mxu0 0.0
    %103 = vmatprep.subr.mxu0 0.0
    %104 = vmatpush1.msra.mxu0 0.0
    %105 = vmatprep.subr.mxu0 0.0
    %106 = vmatpush1.msra.mxu0 0.0
    %107 = vmatprep.subr.mxu0 0.0
    %108 = vmatpush1.msra.mxu0 0.0
    %109 = vmatprep.subr.mxu0 0.0
    %110 = vmatpush1.msra.mxu0 0.0
    %111 = vmatprep.subr.mxu0 0.0
    %112 = vmatpush1.msra.mxu0 0.0
    %113 = vmatprep.mubr.f32.mxu0 0.0
    %114 = vmatmul.mubr.f32.gmra.mrb[0].mxu0 %v44
    %v115 = vpop.f32.mrb[0].mxu0
    %v116 = vadd.f32 %v35, %v115
    %v117 = vpop.f32.mrb[0].mxu0
    %118 = vmatprep.mubr.f32.mxu0 0.0
    %119 = vmatmul.mubr.f32.gmra.mrb[0].mxu0 %v47
    %v120 = vpop.f32.mrb[0].mxu0
    %v121 = vadd.f32 %v40, %v120
    %v122 = vpop.f32.mrb[0].mxu0
    %123 = vdwg.mxu0
    %v124 = vmax.f32 %v116, 0.0
    %v125 = vmax.f32 %v121, 0.0
    %127 = vset.pattern.permute.xlu0 0
    %128 = vperm.xlu0 %127, %v27
    %v129 = vpop.permute.xlu0 %128
    %vm131 = vcmask 80896
    %v133 = vsel %vm131, %v20, 0
    %vm135 = vcmask 1041408
    %v137 = vsel %vm135, %v125, 0
    %139 = vmatprep.subr.mxu0 0.0
    %140 = vmatpush1.msra.mxu0 %v124
    %141 = vmatprep.subr.mxu0 0.0
    %142 = vmatpush1.msra.mxu0 %v137
    %143 = vmatprep.subr.mxu0 0.0
    %144 = vmatpush1.msra.mxu0 0.0
    %145 = vmatprep.subr.mxu0 0.0
    %146 = vmatpush1.msra.mxu0 0.0
    %147 = vmatprep.subr.mxu0 0.0
    %148 = vmatpush1.msra.mxu0 0.0
    %149 = vmatprep.subr.mxu0 0.0
    %150 = vmatpush1.msra.mxu0 0.0
    %151 = vmatprep.subr.mxu0 0.0
    %152 = vmatpush1.msra.mxu0 0.0
    %153 = vmatprep.subr.mxu0 0.0
    %154 = vmatpush1.msra.mxu0 0.0
    %155 = vmatprep.subr.mxu0 0.0
    %156 = vmatpush1.msra.mxu0 0.0
    %157 = vmatprep.subr.mxu0 0.0
    %158 = vmatpush1.msra.mxu0 0.0
    %159 = vmatprep.subr.mxu0 0.0
    %160 = vmatpush1.msra.mxu0 0.0
    %161 = vmatprep.subr.mxu0 0.0
    %162 = vmatpush1.msra.mxu0 0.0
    %163 = vmatprep.subr.mxu0 0.0
    %164 = vmatpush1.msra.mxu0 0.0
    %165 = vmatprep.subr.mxu0 0.0
    %166 = vmatpush1.msra.mxu0 0.0
    %167 = vmatprep.subr.mxu0 0.0
    %168 = vmatpush1.msra.mxu0 0.0
    %169 = vmatprep.subr.mxu0 0.0
    %170 = vmatpush1.msra.mxu0 0.0
    %171 = vmatprep.subr.mxu0 0.0
    %172 = vmatpush1.msra.mxu0 0.0
    %173 = vmatprep.subr.mxu0 0.0
    %174 = vmatpush1.msra.mxu0 0.0
    %175 = vmatprep.subr.mxu0 0.0
    %176 = vmatpush1.msra.mxu0 0.0
    %177 = vmatprep.subr.mxu0 0.0
    %178 = vmatpush1.msra.mxu0 0.0
    %179 = vmatprep.subr.mxu0 0.0
    %180 = vmatpush1.msra.mxu0 0.0
    %181 = vmatprep.subr.mxu0 0.0
    %182 = vmatpush1.msra.mxu0 0.0
    %183 = vmatprep.subr.mxu0 0.0
    %184 = vmatpush1.msra.mxu0 0.0
    %185 = vmatprep.subr.mxu0 0.0
    %186 = vmatpush1.msra.mxu0 0.0
    %187 = vmatprep.subr.mxu0 0.0
    %188 = vmatpush1.msra.mxu0 0.0
    %189 = vmatprep.subr.mxu0 0.0
    %190 = vmatpush1.msra.mxu0 0.0
    %191 = vmatprep.subr.mxu0 0.0
    %192 = vmatpush1.msra.mxu0 0.0
    %193 = vmatprep.subr.mxu0 0.0
    %194 = vmatpush1.msra.mxu0 0.0
    %195 = vmatprep.subr.mxu0 0.0
    %196 = vmatpush1.msra.mxu0 0.0
    %197 = vmatprep.subr.mxu0 0.0
    %198 = vmatpush1.msra.mxu0 0.0
    %199 = vmatprep.subr.mxu0 0.0
    %200 = vmatpush1.msra.mxu0 0.0
    %201 = vmatprep.subr.mxu0 0.0
    %202 = vmatpush1.msra.mxu0 0.0
    %203 = vmatprep.mubr.f32.mxu0 0.0
    %204 = vmatmul.mubr.f32.gmra.mrb[0].mxu0 %v133
    %v205 = vpop.f32.mrb[0].mxu0
    %v206 = vadd.f32 %v129, %v205
    %v207 = vpop.f32.mrb[0].mxu0
    %208 = vdwg.mxu0
    %v209 = vmul.f32 %v206, 0.5
    %v210 = vmul.f32 %v209, 1.442695
    %v211 = vpow.pop %v210
    %v213 = vrot.slane %v211, 2
    %v215 = vmul.f32 %v17, %v213
    %v216 = vadd.f32 %v206, %v215
    %218 = vset.pattern.permute.xlu0 0
    %219 = vperm.xlu0 %218, %v23
    %v220 = vpop.permute.xlu0 %219
    %223 = vset.pattern.permute.xlu0 0
    %224 = vperm.xlu0 %223, %v24
    %v225 = vpop.permute.xlu0 %224
    %v227 = vlaneseq
    %v228 = vshrl.u32 %v227, 7
    %v229 = vsub.s32 0, %v228
    %v230 = vrot.slane %v216, %v229
    %v231 = vmul.f32 %v220, %v230
    %v232 = vmul.f32 %v225, %v230
    %234 = vset.pattern.permute.xlu0 0
    %235 = vperm.xlu0 %234, %v28
    %v236 = vpop.permute.xlu0 %235
    %239 = vset.pattern.permute.xlu0 0
    %240 = vperm.xlu0 %239, %v29
    %v241 = vpop.permute.xlu0 %240
    %v243 = vadd.f32 %v236, %v231
    %v244 = vadd.f32 %v241, %v232
    %245 = vset.pattern.permute.xlu0 1
    %246 = vperm.xlu0 %245, %v23
    %v247 = vpop.permute.xlu0 %246
    %249 = vset.pattern.permute.xlu0 1
    %250 = vperm.xlu0 %249, %v24
    %v251 = vpop.permute.xlu0 %250
    %v253 = vlaneseq
    %v254 = vshrl.u32 %v253, 7
    %v255 = vsub.s32 1, %v254
    %v256 = vrot.slane %v216, %v255
    %v257 = vmul.f32 %v247, %v256
    %v258 = vmul.f32 %v251, %v256
    %v259 = vadd.f32 %v243, %v257
    %v260 = vadd.f32 %v244, %v258
    %v261 = vmax.f32 %v259, 0.0
    %v262 = vmax.f32 %v260, 0.0
    %264 = vset.pattern.permute.xlu0 0
    %265 = vperm.xlu0 %264, %v30
    %v266 = vpop.permute.xlu0 %265
    %269 = vset.pattern.permute.xlu0 0
    %270 = vperm.xlu0 %269, %v31
    %v271 = vpop.permute.xlu0 %270
    %v274 = vsel %vm131, %v21, 0
    %v277 = vsel %vm131, %v22, 0
    %v280 = vsel %vm135, %v262, 0
    %282 = vmatprep.subr.mxu0 0.0
    %283 = vmatpush1.msra.mxu0 %v261
    %284 = vmatprep.subr.mxu0 0.0
    %285 = vmatpush1.msra.mxu0 %v280
    %286 = vmatprep.subr.mxu0 0.0
    %287 = vmatpush1.msra.mxu0 0.0
    %288 = vmatprep.subr.mxu0 0.0
    %289 = vmatpush1.msra.mxu0 0.0
    %290 = vmatprep.subr.mxu0 0.0
    %291 = vmatpush1.msra.mxu0 0.0
    %292 = vmatprep.subr.mxu0 0.0
    %293 = vmatpush1.msra.mxu0 0.0
    %294 = vmatprep.subr.mxu0 0.0
    %295 = vmatpush1.msra.mxu0 0.0
    %296 = vmatprep.subr.mxu0 0.0
    %297 = vmatpush1.msra.mxu0 0.0
    %298 = vmatprep.subr.mxu0 0.0
    %299 = vmatpush1.msra.mxu0 0.0
    %300 = vmatprep.subr.mxu0 0.0
    %301 = vmatpush1.msra.mxu0 0.0
    %302 = vmatprep.subr.mxu0 0.0
    %303 = vmatpush1.msra.mxu0 0.0
    %304 = vmatprep.subr.mxu0 0.0
    %305 = vmatpush1.msra.mxu0 0.0
    %306 = vmatprep.subr.mxu0 0.0
    %307 = vmatpush1.msra.mxu0 0.0
    %308 = vmatprep.subr.mxu0 0.0
    %309 = vmatpush1.msra.mxu0 0.0
    %310 = vmatprep.subr.mxu0 0.0
    %311 = vmatpush1.msra.mxu0 0.0
    %312 = vmatprep.subr.mxu0 0.0
    %313 = vmatpush1.msra.mxu0 0.0
    %314 = vmatprep.subr.mxu0 0.0
    %315 = vmatpush1.msra.mxu0 0.0
    %316 = vmatprep.subr.mxu0 0.0
    %317 = vmatpush1.msra.mxu0 0.0
    %318 = vmatprep.subr.mxu0 0.0
    %319 = vmatpush1.msra.mxu0 0.0
    %320 = vmatprep.subr.mxu0 0.0
    %321 = vmatpush1.msra.mxu0 0.0
    %322 = vmatprep.subr.mxu0 0.0
    %323 = vmatpush1.msra.mxu0 0.0
    %324 = vmatprep.subr.mxu0 0.0
    %325 = vmatpush1.msra.mxu0 0.0
    %326 = vmatprep.subr.mxu0 0.0
    %327 = vmatpush1.msra.mxu0 0.0
    %328 = vmatprep.subr.mxu0 0.0
    %329 = vmatpush1.msra.mxu0 0.0
    %330 = vmatprep.subr.mxu0 0.0
    %331 = vmatpush1.msra.mxu0 0.0
    %332 = vmatprep.subr.mxu0 0.0
    %333 = vmatpush1.msra.mxu0 0.0
    %334 = vmatprep.subr.mxu0 0.0
    %335 = vmatpush1.msra.mxu0 0.0
    %336 = vmatprep.subr.mxu0 0.0
    %337 = vmatpush1.msra.mxu0 0.0
    %338 = vmatprep.subr.mxu0 0.0
    %339 = vmatpush1.msra.mxu0 0.0
    %340 = vmatprep.subr.mxu0 0.0
    %341 = vmatpush1.msra.mxu0 0.0
    %342 = vmatprep.subr.mxu0 0.0
    %343 = vmatpush1.msra.mxu0 0.0
    %344 = vmatprep.subr.mxu0 0.0
    %345 = vmatpush1.msra.mxu0 0.0
    %346 = vmatprep.mubr.f32.mxu0 0.0
    %347 = vmatmul.mubr.f32.gmra.mrb[0].mxu0 %v274
    %v348 = vpop.f32.mrb[0].mxu0
    %v349 = vadd.f32 %v266, %v348
    %v350 = vpop.f32.mrb[0].mxu0
    %351 = vmatprep.mubr.f32.mxu0 0.0
    %352 = vmatmul.mubr.f32.gmra.mrb[0].mxu0 %v277
    %v353 = vpop.f32.mrb[0].mxu0
    %v354 = vadd.f32 %v271, %v353
    %v355 = vpop.f32.mrb[0].mxu0
    %356 = vdwg.mxu0
    %357 = vst [vmem:[#allocation2] sm:$0xff] %v349
    %358 = vst [vmem:[#allocation2 + $0x8] sm:$0xff] %v354
    %359 = vst [vmem:[#allocation2 + $0x10] sm:$0xf] %v206
    // Predicated region
    $region14: #{tpu_custom_call.1} parent=1 // pred_check
      _
    $region15: #{tpu_custom_call.1} parent=1 // pred_check_branch
      %361 = sbr.rel (0) target = $region17
    $region16: #{tpu_custom_call.1} parent=1 // pred_region
      %s363 = ssub.s32 384, 384
      %364 = vsyncadd [#allocation3], %s363
      %s365 = sshll.u32 [#allocation2], 4
      %s366 = int_to_ptr.vmem [resolvable:$true] %s365
      %371 = dma.vmem_to_hbm [thread:$0]  %s366, 384, %s3, [#allocation3], 128, 128, 8
    $region17: #{tpu_custom_call.1} parent=1 // pred_fallthru
      _
    // Predicated region
    $region18: #{tpu_custom_call.1} parent=1 // pred_check
      _
    $region19: #{tpu_custom_call.1} parent=1 // pred_check_branch
      %373 = sbr.rel (0) target = $region21
    $region20: #{tpu_custom_call.1} parent=1 // pred_region
      %374 = dma.done [#allocation3], 384
    $region21: #{tpu_custom_call.1} parent=1 // pred_fallthru
      _
    %375 = vsyncpa [#allocation3], 1

</llo_original>
